<compile_context>
chip_gen: v6e
topology: v6e:2x2x1
jax: 0.10.0
libtpu: 0.0.40
codegen_flags: <defaults>
</compile_context>

<pallas_src>
import jax
import jax.numpy as jnp
from jax import lax
from jax.experimental import pallas as pl
from jax.experimental.pallas import tpu as pltpu


def _lstm_kernel(x_ref, fused_ref, whh_ref, bias_ref, wout_ref, bout_ref,
                 out_ref):
    """Whole-model kernel.

    x_ref:     (T*B, 1) int32   time-major flattened token ids (row = t*B + b)
    fused_ref: (V, 4H)  f32     (= embedding @ weight_ih.T)
    whh_ref:   (H, 4H)  f32     (= weight_hh.T)
    bias_ref:  (1, 4H)  f32     (= bias_ih + bias_hh)
    wout_ref:  (1, H)   f32     (= linear.weight)
    bout_ref:  (1, 1)   f32
    out_ref:   (B, 1)   f32
    """
    TB = x_ref.shape[0]
    B = out_ref.shape[0]
    T = TB // B
    V, G = fused_ref.shape          # G = 4H
    H = whh_ref.shape[0]

    # ---- Preamble (off the serial chain): input path for ALL timesteps ----
    # One-hot embedding+projection lookup as a single (T*B, V) @ (V, 4H) matmul.
    # Out-of-range ids (>= V) give an all-zero row (zero embedding), like the
    # padding row; bias is added separately so it is never lost.
    iota_v = lax.broadcasted_iota(jnp.int32, (TB, V), 1)
    onehot = (x_ref[...] == iota_v).astype(jnp.float32)             # (T*B, V)
    gates_x = (jnp.dot(onehot, fused_ref[...],
                       preferred_element_type=jnp.float32)
               + bias_ref[...])                                     # (T*B, 4H)

    w_hh = whh_ref[...]                                             # (H, 4H)

    # ---- Recurrence: only h @ w_hh + nonlinearities per step (unrolled) ----
    h = jnp.zeros((B, H), jnp.float32)
    c = jnp.zeros((B, H), jnp.float32)
    for t in range(T):                       # T is static & small -> full unroll
        g_t = gates_x[t * B:(t + 1) * B, :]                         # static slice
        gates = g_t + jnp.dot(h, w_hh, preferred_element_type=jnp.float32)

        i_g = jax.nn.sigmoid(gates[:, 0 * H:1 * H])
        f_g = jax.nn.sigmoid(gates[:, 1 * H:2 * H])
        g_g = jnp.tanh(gates[:, 2 * H:3 * H])
        o_g = jax.nn.sigmoid(gates[:, 3 * H:4 * H])

        c = f_g * c + i_g * g_g
        h = o_g * jnp.tanh(c)

    # ---- Epilogue: final Linear(H -> 1) as VPU multiply + lane reduce ----
    out_ref[...] = (jnp.sum(h * wout_ref[...], axis=-1, keepdims=True)
                    + bout_ref[...])


@jax.jit
def text_mode_forward(x, embed, w_ih, w_hh, b_ih, b_hh, w_out, b_out):
    """x: (B, T) int token ids.  Returns (B, 1) f32, matching
    linear(h).view(-1, 1) of the PyTorch module."""
    B, T = x.shape
    V = embed.shape[0]
    H = w_hh.shape[1]
    G = 4 * H

    # Fuse embedding table into the input-to-hidden weights (one-time, tiny).
    fused = jnp.dot(embed.astype(jnp.float32), w_ih.T.astype(jnp.float32),
                    precision=lax.Precision.HIGHEST)                # (V, 4H)
    bias = (b_ih + b_hh).reshape(1, -1).astype(jnp.float32)         # (1, 4H)
    whh_t = w_hh.T.astype(jnp.float32)                              # (H, 4H)
    wout = w_out.astype(jnp.float32)                                # (1, H)
    bout = b_out.reshape(1, 1).astype(jnp.float32)                  # (1, 1)

    # Time-major flattened ids: row index = t*B + b  -> leading-axis slices only.
    x_tb = x.astype(jnp.int32).T.reshape(T * B, 1)                  # (T*B, 1)

    cost = pl.CostEstimate(
        flops=2 * T * B * V * G + 2 * T * B * H * G + 2 * B * H,
        transcendentals=5 * T * B * H,
        bytes_accessed=4 * (x_tb.size + V * G + H * G + G + H + 1 + B),
    )

    return pl.pallas_call(
        _lstm_kernel,
        out_shape=jax.ShapeDtypeStruct((B, 1), jnp.float32),
        # Single-invocation kernel; every operand fits VMEM as a full block.
        in_specs=[pl.BlockSpec(memory_space=pltpu.MemorySpace.VMEM)] * 6,
        out_specs=pl.BlockSpec(memory_space=pltpu.MemorySpace.VMEM),
        cost_estimate=cost,
    )(x_tb, fused, whh_t, bias, wout, bout)


def _reference(x, embed, w_ih, w_hh, b_ih, b_hh, w_out, b_out):
    """Pure-JAX reference replicating torch semantics."""
    emb = jnp.take(embed, x, axis=0)                                # (B, T, E)
    B, T, E = emb.shape
    H = w_hh.shape[1]

    def step(carry, x_t):
        h, c = carry
        gates = x_t @ w_ih.T + b_ih + h @ w_hh.T + b_hh
        i_g = jax.nn.sigmoid(gates[:, 0 * H:1 * H])
        f_g = jax.nn.sigmoid(gates[:, 1 * H:2 * H])
        g_g = jnp.tanh(gates[:, 2 * H:3 * H])
        o_g = jax.nn.sigmoid(gates[:, 3 * H:4 * H])
        c_new = f_g * c + i_g * g_g
        h_new = o_g * jnp.tanh(c_new)
        return (h_new, c_new), None

    (h, _), _ = lax.scan(step,
                         (jnp.zeros((B, H)), jnp.zeros((B, H))),
                         jnp.swapaxes(emb, 0, 1))
    return h @ w_out.T + b_out


if __name__ == "__main__":
    V, E, H = 5, 16, 8      # vocab, embed dim, LSTM hidden (from the module)
    B, T = 2, 8             # small batch / sequence length

    key = jax.random.PRNGKey(0)
    k_x, k_emb, k_wih, k_whh, k_bih, k_bhh, k_wo, k_bo = jax.random.split(key, 8)

    # token ids in [0, V); 0 is padding_idx
    x = jax.random.randint(k_x, (B, T), 0, V, dtype=jnp.int32)

    # deterministic parameter init (shapes from the module's __init__)
    embed = jax.random.normal(k_emb, (V, E), jnp.float32)
    embed = embed.at[0].set(0.0)                      # padding_idx=0 row zeroed
    s = 1.0 / jnp.sqrt(H)
    w_ih = jax.random.uniform(k_wih, (4 * H, E), jnp.float32, -s, s)
    w_hh = jax.random.uniform(k_whh, (4 * H, H), jnp.float32, -s, s)
    b_ih = jax.random.uniform(k_bih, (4 * H,), jnp.float32, -s, s)
    b_hh = jax.random.uniform(k_bhh, (4 * H,), jnp.float32, -s, s)
    s2 = 1.0 / jnp.sqrt(H)
    w_out = jax.random.uniform(k_wo, (1, H), jnp.float32, -s2, s2)
    b_out = jax.random.uniform(k_bo, (1,), jnp.float32, -s2, s2)

    out = text_mode_forward(x, embed, w_ih, w_hh, b_ih, b_hh, w_out, b_out)
    out = jax.block_until_ready(out)

    ref = _reference(x, embed, w_ih, w_hh, b_ih, b_hh, w_out, b_out)
    assert out.shape == (B, 1)
    assert jnp.allclose(out, ref, rtol=1e-3, atol=1e-4), (out, ref)

    print("KERNEL_OK")
</pallas_src>

<mosaic_0001>
module attributes {stable_mosaic.version = 11 : i64} {
  func.func @_lstm_kernel(%arg0: memref<16x1xi32, #tpu.memory_space<vmem>>, %arg1: memref<5x32xf32, #tpu.memory_space<vmem>>, %arg2: memref<8x32xf32, #tpu.memory_space<vmem>>, %arg3: memref<1x32xf32, #tpu.memory_space<vmem>>, %arg4: memref<1x8xf32, #tpu.memory_space<vmem>>, %arg5: memref<1x1xf32, #tpu.memory_space<vmem>>, %arg6: memref<2x1xf32, #tpu.memory_space<vmem>>) attributes {dimension_semantics = [], scalar_prefetch = 0 : i64, scratch_operands = 0 : i64, tpu.core_type = #tpu.core_type<tc>} {
    %0 = tpu.iota {dimensions = array<i32: 1>} : vector<16x5xi32>
    %c0 = arith.constant 0 : index
    %c0_0 = arith.constant 0 : index
    %1 = vector.load %arg0[%c0, %c0_0] : memref<16x1xi32, #tpu.memory_space<vmem>>, vector<16x1xi32>
    %2 = vector.broadcast %1 : vector<16x1xi32> to vector<16x5xi32>
    %3 = arith.cmpi eq, %2, %0 : vector<16x5xi32>
    %4 = arith.extui %3 : vector<16x5xi1> to vector<16x5xi32>
    %5 = arith.sitofp %4 : vector<16x5xi32> to vector<16x5xf32>
    %c0_1 = arith.constant 0 : index
    %c0_2 = arith.constant 0 : index
    %6 = vector.load %arg1[%c0_1, %c0_2] : memref<5x32xf32, #tpu.memory_space<vmem>>, vector<5x32xf32>
    %cst = arith.constant dense<0.000000e+00> : vector<16x32xf32>
    %7 = tpu.matmul %5, %6, %cst {dimension_numbers = #tpu.dot_dimension_numbers<[1], [0], [0], [1], [0, 0, 1, 1], [], []>} : vector<16x5xf32>, vector<5x32xf32>, vector<16x32xf32> -> vector<16x32xf32>
    %c0_3 = arith.constant 0 : index
    %c0_4 = arith.constant 0 : index
    %8 = vector.load %arg3[%c0_3, %c0_4] : memref<1x32xf32, #tpu.memory_space<vmem>>, vector<1x32xf32>
    %9 = vector.broadcast %8 : vector<1x32xf32> to vector<16x32xf32>
    %10 = arith.addf %7, %9 : vector<16x32xf32>
    %c0_5 = arith.constant 0 : index
    %c0_6 = arith.constant 0 : index
    %11 = vector.load %arg2[%c0_5, %c0_6] : memref<8x32xf32, #tpu.memory_space<vmem>>, vector<8x32xf32>
    %cst_7 = arith.constant 0.000000e+00 : f32
    %12 = vector.broadcast %cst_7 : f32 to vector<2x8xf32>
    %cst_8 = arith.constant 0.000000e+00 : f32
    %13 = vector.broadcast %cst_8 : f32 to vector<2x8xf32>
    %14 = vector.extract_strided_slice %10 {offsets = [0, 0], sizes = [2, 32], strides = [1, 1]} : vector<16x32xf32> to vector<2x32xf32>
    %cst_9 = arith.constant dense<0.000000e+00> : vector<2x32xf32>
    %15 = tpu.matmul %12, %11, %cst_9 {dimension_numbers = #tpu.dot_dimension_numbers<[1], [0], [0], [1], [0, 0, 1, 1], [], []>} : vector<2x8xf32>, vector<8x32xf32>, vector<2x32xf32> -> vector<2x32xf32>
    %16 = arith.addf %14, %15 : vector<2x32xf32>
    %17 = vector.extract_strided_slice %16 {offsets = [0, 0], sizes = [2, 8], strides = [1, 1]} : vector<2x32xf32> to vector<2x8xf32>
    %18 = arith.negf %17 : vector<2x8xf32>
    %19 = math.exp %18 : vector<2x8xf32>
    %cst_10 = arith.constant 1.000000e+00 : f32
    %20 = vector.broadcast %cst_10 : f32 to vector<2x8xf32>
    %21 = arith.addf %20, %19 : vector<2x8xf32>
    %22 = arith.divf %20, %21 : vector<2x8xf32>
    %23 = vector.extract_strided_slice %16 {offsets = [0, 8], sizes = [2, 8], strides = [1, 1]} : vector<2x32xf32> to vector<2x8xf32>
    %24 = arith.negf %23 : vector<2x8xf32>
    %25 = math.exp %24 : vector<2x8xf32>
    %cst_11 = arith.constant 1.000000e+00 : f32
    %26 = vector.broadcast %cst_11 : f32 to vector<2x8xf32>
    %27 = arith.addf %26, %25 : vector<2x8xf32>
    %28 = arith.divf %26, %27 : vector<2x8xf32>
    %29 = vector.extract_strided_slice %16 {offsets = [0, 16], sizes = [2, 8], strides = [1, 1]} : vector<2x32xf32> to vector<2x8xf32>
    %30 = math.tanh %29 : vector<2x8xf32>
    %31 = vector.extract_strided_slice %16 {offsets = [0, 24], sizes = [2, 8], strides = [1, 1]} : vector<2x32xf32> to vector<2x8xf32>
    %32 = arith.negf %31 : vector<2x8xf32>
    %33 = math.exp %32 : vector<2x8xf32>
    %cst_12 = arith.constant 1.000000e+00 : f32
    %34 = vector.broadcast %cst_12 : f32 to vector<2x8xf32>
    %35 = arith.addf %34, %33 : vector<2x8xf32>
    %36 = arith.divf %34, %35 : vector<2x8xf32>
    %37 = arith.mulf %28, %13 : vector<2x8xf32>
    %38 = arith.mulf %22, %30 : vector<2x8xf32>
    %39 = arith.addf %37, %38 : vector<2x8xf32>
    %40 = math.tanh %39 : vector<2x8xf32>
    %41 = arith.mulf %36, %40 : vector<2x8xf32>
    %42 = vector.extract_strided_slice %10 {offsets = [2, 0], sizes = [2, 32], strides = [1, 1]} : vector<16x32xf32> to vector<2x32xf32>
    %cst_13 = arith.constant dense<0.000000e+00> : vector<2x32xf32>
    %43 = tpu.matmul %41, %11, %cst_13 {dimension_numbers = #tpu.dot_dimension_numbers<[1], [0], [0], [1], [0, 0, 1, 1], [], []>} : vector<2x8xf32>, vector<8x32xf32>, vector<2x32xf32> -> vector<2x32xf32>
    %44 = arith.addf %42, %43 : vector<2x32xf32>
    %45 = vector.extract_strided_slice %44 {offsets = [0, 0], sizes = [2, 8], strides = [1, 1]} : vector<2x32xf32> to vector<2x8xf32>
    %46 = arith.negf %45 : vector<2x8xf32>
    %47 = math.exp %46 : vector<2x8xf32>
    %cst_14 = arith.constant 1.000000e+00 : f32
    %48 = vector.broadcast %cst_14 : f32 to vector<2x8xf32>
    %49 = arith.addf %48, %47 : vector<2x8xf32>
    %50 = arith.divf %48, %49 : vector<2x8xf32>
    %51 = vector.extract_strided_slice %44 {offsets = [0, 8], sizes = [2, 8], strides = [1, 1]} : vector<2x32xf32> to vector<2x8xf32>
    %52 = arith.negf %51 : vector<2x8xf32>
    %53 = math.exp %52 : vector<2x8xf32>
    %cst_15 = arith.constant 1.000000e+00 : f32
    %54 = vector.broadcast %cst_15 : f32 to vector<2x8xf32>
    %55 = arith.addf %54, %53 : vector<2x8xf32>
    %56 = arith.divf %54, %55 : vector<2x8xf32>
    %57 = vector.extract_strided_slice %44 {offsets = [0, 16], sizes = [2, 8], strides = [1, 1]} : vector<2x32xf32> to vector<2x8xf32>
    %58 = math.tanh %57 : vector<2x8xf32>
    %59 = vector.extract_strided_slice %44 {offsets = [0, 24], sizes = [2, 8], strides = [1, 1]} : vector<2x32xf32> to vector<2x8xf32>
    %60 = arith.negf %59 : vector<2x8xf32>
    %61 = math.exp %60 : vector<2x8xf32>
    %cst_16 = arith.constant 1.000000e+00 : f32
    %62 = vector.broadcast %cst_16 : f32 to vector<2x8xf32>
    %63 = arith.addf %62, %61 : vector<2x8xf32>
    %64 = arith.divf %62, %63 : vector<2x8xf32>
    %65 = arith.mulf %56, %39 : vector<2x8xf32>
    %66 = arith.mulf %50, %58 : vector<2x8xf32>
    %67 = arith.addf %65, %66 : vector<2x8xf32>
    %68 = math.tanh %67 : vector<2x8xf32>
    %69 = arith.mulf %64, %68 : vector<2x8xf32>
    %70 = vector.extract_strided_slice %10 {offsets = [4, 0], sizes = [2, 32], strides = [1, 1]} : vector<16x32xf32> to vector<2x32xf32>
    %cst_17 = arith.constant dense<0.000000e+00> : vector<2x32xf32>
    %71 = tpu.matmul %69, %11, %cst_17 {dimension_numbers = #tpu.dot_dimension_numbers<[1], [0], [0], [1], [0, 0, 1, 1], [], []>} : vector<2x8xf32>, vector<8x32xf32>, vector<2x32xf32> -> vector<2x32xf32>
    %72 = arith.addf %70, %71 : vector<2x32xf32>
    %73 = vector.extract_strided_slice %72 {offsets = [0, 0], sizes = [2, 8], strides = [1, 1]} : vector<2x32xf32> to vector<2x8xf32>
    %74 = arith.negf %73 : vector<2x8xf32>
    %75 = math.exp %74 : vector<2x8xf32>
    %cst_18 = arith.constant 1.000000e+00 : f32
    %76 = vector.broadcast %cst_18 : f32 to vector<2x8xf32>
    %77 = arith.addf %76, %75 : vector<2x8xf32>
    %78 = arith.divf %76, %77 : vector<2x8xf32>
    %79 = vector.extract_strided_slice %72 {offsets = [0, 8], sizes = [2, 8], strides = [1, 1]} : vector<2x32xf32> to vector<2x8xf32>
    %80 = arith.negf %79 : vector<2x8xf32>
    %81 = math.exp %80 : vector<2x8xf32>
    %cst_19 = arith.constant 1.000000e+00 : f32
    %82 = vector.broadcast %cst_19 : f32 to vector<2x8xf32>
    %83 = arith.addf %82, %81 : vector<2x8xf32>
    %84 = arith.divf %82, %83 : vector<2x8xf32>
    %85 = vector.extract_strided_slice %72 {offsets = [0, 16], sizes = [2, 8], strides = [1, 1]} : vector<2x32xf32> to vector<2x8xf32>
    %86 = math.tanh %85 : vector<2x8xf32>
    %87 = vector.extract_strided_slice %72 {offsets = [0, 24], sizes = [2, 8], strides = [1, 1]} : vector<2x32xf32> to vector<2x8xf32>
    %88 = arith.negf %87 : vector<2x8xf32>
    %89 = math.exp %88 : vector<2x8xf32>
    %cst_20 = arith.constant 1.000000e+00 : f32
    %90 = vector.broadcast %cst_20 : f32 to vector<2x8xf32>
    %91 = arith.addf %90, %89 : vector<2x8xf32>
    %92 = arith.divf %90, %91 : vector<2x8xf32>
    %93 = arith.mulf %84, %67 : vector<2x8xf32>
    %94 = arith.mulf %78, %86 : vector<2x8xf32>
    %95 = arith.addf %93, %94 : vector<2x8xf32>
    %96 = math.tanh %95 : vector<2x8xf32>
    %97 = arith.mulf %92, %96 : vector<2x8xf32>
    %98 = vector.extract_strided_slice %10 {offsets = [6, 0], sizes = [2, 32], strides = [1, 1]} : vector<16x32xf32> to vector<2x32xf32>
    %cst_21 = arith.constant dense<0.000000e+00> : vector<2x32xf32>
    %99 = tpu.matmul %97, %11, %cst_21 {dimension_numbers = #tpu.dot_dimension_numbers<[1], [0], [0], [1], [0, 0, 1, 1], [], []>} : vector<2x8xf32>, vector<8x32xf32>, vector<2x32xf32> -> vector<2x32xf32>
    %100 = arith.addf %98, %99 : vector<2x32xf32>
    %101 = vector.extract_strided_slice %100 {offsets = [0, 0], sizes = [2, 8], strides = [1, 1]} : vector<2x32xf32> to vector<2x8xf32>
    %102 = arith.negf %101 : vector<2x8xf32>
    %103 = math.exp %102 : vector<2x8xf32>
    %cst_22 = arith.constant 1.000000e+00 : f32
    %104 = vector.broadcast %cst_22 : f32 to vector<2x8xf32>
    %105 = arith.addf %104, %103 : vector<2x8xf32>
    %106 = arith.divf %104, %105 : vector<2x8xf32>
    %107 = vector.extract_strided_slice %100 {offsets = [0, 8], sizes = [2, 8], strides = [1, 1]} : vector<2x32xf32> to vector<2x8xf32>
    %108 = arith.negf %107 : vector<2x8xf32>
    %109 = math.exp %108 : vector<2x8xf32>
    %cst_23 = arith.constant 1.000000e+00 : f32
    %110 = vector.broadcast %cst_23 : f32 to vector<2x8xf32>
    %111 = arith.addf %110, %109 : vector<2x8xf32>
    %112 = arith.divf %110, %111 : vector<2x8xf32>
    %113 = vector.extract_strided_slice %100 {offsets = [0, 16], sizes = [2, 8], strides = [1, 1]} : vector<2x32xf32> to vector<2x8xf32>
    %114 = math.tanh %113 : vector<2x8xf32>
    %115 = vector.extract_strided_slice %100 {offsets = [0, 24], sizes = [2, 8], strides = [1, 1]} : vector<2x32xf32> to vector<2x8xf32>
    %116 = arith.negf %115 : vector<2x8xf32>
    %117 = math.exp %116 : vector<2x8xf32>
    %cst_24 = arith.constant 1.000000e+00 : f32
    %118 = vector.broadcast %cst_24 : f32 to vector<2x8xf32>
    %119 = arith.addf %118, %117 : vector<2x8xf32>
    %120 = arith.divf %118, %119 : vector<2x8xf32>
    %121 = arith.mulf %112, %95 : vector<2x8xf32>
    %122 = arith.mulf %106, %114 : vector<2x8xf32>
    %123 = arith.addf %121, %122 : vector<2x8xf32>
    %124 = math.tanh %123 : vector<2x8xf32>
    %125 = arith.mulf %120, %124 : vector<2x8xf32>
    %126 = vector.extract_strided_slice %10 {offsets = [8, 0], sizes = [2, 32], strides = [1, 1]} : vector<16x32xf32> to vector<2x32xf32>
    %cst_25 = arith.constant dense<0.000000e+00> : vector<2x32xf32>
    %127 = tpu.matmul %125, %11, %cst_25 {dimension_numbers = #tpu.dot_dimension_numbers<[1], [0], [0], [1], [0, 0, 1, 1], [], []>} : vector<2x8xf32>, vector<8x32xf32>, vector<2x32xf32> -> vector<2x32xf32>
    %128 = arith.addf %126, %127 : vector<2x32xf32>
    %129 = vector.extract_strided_slice %128 {offsets = [0, 0], sizes = [2, 8], strides = [1, 1]} : vector<2x32xf32> to vector<2x8xf32>
    %130 = arith.negf %129 : vector<2x8xf32>
    %131 = math.exp %130 : vector<2x8xf32>
    %cst_26 = arith.constant 1.000000e+00 : f32
    %132 = vector.broadcast %cst_26 : f32 to vector<2x8xf32>
    %133 = arith.addf %132, %131 : vector<2x8xf32>
    %134 = arith.divf %132, %133 : vector<2x8xf32>
    %135 = vector.extract_strided_slice %128 {offsets = [0, 8], sizes = [2, 8], strides = [1, 1]} : vector<2x32xf32> to vector<2x8xf32>
    %136 = arith.negf %135 : vector<2x8xf32>
    %137 = math.exp %136 : vector<2x8xf32>
    %cst_27 = arith.constant 1.000000e+00 : f32
    %138 = vector.broadcast %cst_27 : f32 to vector<2x8xf32>
    %139 = arith.addf %138, %137 : vector<2x8xf32>
    %140 = arith.divf %138, %139 : vector<2x8xf32>
    %141 = vector.extract_strided_slice %128 {offsets = [0, 16], sizes = [2, 8], strides = [1, 1]} : vector<2x32xf32> to vector<2x8xf32>
    %142 = math.tanh %141 : vector<2x8xf32>
    %143 = vector.extract_strided_slice %128 {offsets = [0, 24], sizes = [2, 8], strides = [1, 1]} : vector<2x32xf32> to vector<2x8xf32>
    %144 = arith.negf %143 : vector<2x8xf32>
    %145 = math.exp %144 : vector<2x8xf32>
    %cst_28 = arith.constant 1.000000e+00 : f32
    %146 = vector.broadcast %cst_28 : f32 to vector<2x8xf32>
    %147 = arith.addf %146, %145 : vector<2x8xf32>
    %148 = arith.divf %146, %147 : vector<2x8xf32>
    %149 = arith.mulf %140, %123 : vector<2x8xf32>
    %150 = arith.mulf %134, %142 : vector<2x8xf32>
    %151 = arith.addf %149, %150 : vector<2x8xf32>
    %152 = math.tanh %151 : vector<2x8xf32>
    %153 = arith.mulf %148, %152 : vector<2x8xf32>
    %154 = vector.extract_strided_slice %10 {offsets = [10, 0], sizes = [2, 32], strides = [1, 1]} : vector<16x32xf32> to vector<2x32xf32>
    %cst_29 = arith.constant dense<0.000000e+00> : vector<2x32xf32>
    %155 = tpu.matmul %153, %11, %cst_29 {dimension_numbers = #tpu.dot_dimension_numbers<[1], [0], [0], [1], [0, 0, 1, 1], [], []>} : vector<2x8xf32>, vector<8x32xf32>, vector<2x32xf32> -> vector<2x32xf32>
    %156 = arith.addf %154, %155 : vector<2x32xf32>
    %157 = vector.extract_strided_slice %156 {offsets = [0, 0], sizes = [2, 8], strides = [1, 1]} : vector<2x32xf32> to vector<2x8xf32>
    %158 = arith.negf %157 : vector<2x8xf32>
    %159 = math.exp %158 : vector<2x8xf32>
    %cst_30 = arith.constant 1.000000e+00 : f32
    %160 = vector.broadcast %cst_30 : f32 to vector<2x8xf32>
    %161 = arith.addf %160, %159 : vector<2x8xf32>
    %162 = arith.divf %160, %161 : vector<2x8xf32>
    %163 = vector.extract_strided_slice %156 {offsets = [0, 8], sizes = [2, 8], strides = [1, 1]} : vector<2x32xf32> to vector<2x8xf32>
    %164 = arith.negf %163 : vector<2x8xf32>
    %165 = math.exp %164 : vector<2x8xf32>
    %cst_31 = arith.constant 1.000000e+00 : f32
    %166 = vector.broadcast %cst_31 : f32 to vector<2x8xf32>
    %167 = arith.addf %166, %165 : vector<2x8xf32>
    %168 = arith.divf %166, %167 : vector<2x8xf32>
    %169 = vector.extract_strided_slice %156 {offsets = [0, 16], sizes = [2, 8], strides = [1, 1]} : vector<2x32xf32> to vector<2x8xf32>
    %170 = math.tanh %169 : vector<2x8xf32>
    %171 = vector.extract_strided_slice %156 {offsets = [0, 24], sizes = [2, 8], strides = [1, 1]} : vector<2x32xf32> to vector<2x8xf32>
    %172 = arith.negf %171 : vector<2x8xf32>
    %173 = math.exp %172 : vector<2x8xf32>
    %cst_32 = arith.constant 1.000000e+00 : f32
    %174 = vector.broadcast %cst_32 : f32 to vector<2x8xf32>
    %175 = arith.addf %174, %173 : vector<2x8xf32>
    %176 = arith.divf %174, %175 : vector<2x8xf32>
    %177 = arith.mulf %168, %151 : vector<2x8xf32>
    %178 = arith.mulf %162, %170 : vector<2x8xf32>
    %179 = arith.addf %177, %178 : vector<2x8xf32>
    %180 = math.tanh %179 : vector<2x8xf32>
    %181 = arith.mulf %176, %180 : vector<2x8xf32>
    %182 = vector.extract_strided_slice %10 {offsets = [12, 0], sizes = [2, 32], strides = [1, 1]} : vector<16x32xf32> to vector<2x32xf32>
    %cst_33 = arith.constant dense<0.000000e+00> : vector<2x32xf32>
    %183 = tpu.matmul %181, %11, %cst_33 {dimension_numbers = #tpu.dot_dimension_numbers<[1], [0], [0], [1], [0, 0, 1, 1], [], []>} : vector<2x8xf32>, vector<8x32xf32>, vector<2x32xf32> -> vector<2x32xf32>
    %184 = arith.addf %182, %183 : vector<2x32xf32>
    %185 = vector.extract_strided_slice %184 {offsets = [0, 0], sizes = [2, 8], strides = [1, 1]} : vector<2x32xf32> to vector<2x8xf32>
    %186 = arith.negf %185 : vector<2x8xf32>
    %187 = math.exp %186 : vector<2x8xf32>
    %cst_34 = arith.constant 1.000000e+00 : f32
    %188 = vector.broadcast %cst_34 : f32 to vector<2x8xf32>
    %189 = arith.addf %188, %187 : vector<2x8xf32>
    %190 = arith.divf %188, %189 : vector<2x8xf32>
    %191 = vector.extract_strided_slice %184 {offsets = [0, 8], sizes = [2, 8], strides = [1, 1]} : vector<2x32xf32> to vector<2x8xf32>
    %192 = arith.negf %191 : vector<2x8xf32>
    %193 = math.exp %192 : vector<2x8xf32>
    %cst_35 = arith.constant 1.000000e+00 : f32
    %194 = vector.broadcast %cst_35 : f32 to vector<2x8xf32>
    %195 = arith.addf %194, %193 : vector<2x8xf32>
    %196 = arith.divf %194, %195 : vector<2x8xf32>
    %197 = vector.extract_strided_slice %184 {offsets = [0, 16], sizes = [2, 8], strides = [1, 1]} : vector<2x32xf32> to vector<2x8xf32>
    %198 = math.tanh %197 : vector<2x8xf32>
    %199 = vector.extract_strided_slice %184 {offsets = [0, 24], sizes = [2, 8], strides = [1, 1]} : vector<2x32xf32> to vector<2x8xf32>
    %200 = arith.negf %199 : vector<2x8xf32>
    %201 = math.exp %200 : vector<2x8xf32>
    %cst_36 = arith.constant 1.000000e+00 : f32
    %202 = vector.broadcast %cst_36 : f32 to vector<2x8xf32>
    %203 = arith.addf %202, %201 : vector<2x8xf32>
    %204 = arith.divf %202, %203 : vector<2x8xf32>
    %205 = arith.mulf %196, %179 : vector<2x8xf32>
    %206 = arith.mulf %190, %198 : vector<2x8xf32>
    %207 = arith.addf %205, %206 : vector<2x8xf32>
    %208 = math.tanh %207 : vector<2x8xf32>
    %209 = arith.mulf %204, %208 : vector<2x8xf32>
    %210 = vector.extract_strided_slice %10 {offsets = [14, 0], sizes = [2, 32], strides = [1, 1]} : vector<16x32xf32> to vector<2x32xf32>
    %cst_37 = arith.constant dense<0.000000e+00> : vector<2x32xf32>
    %211 = tpu.matmul %209, %11, %cst_37 {dimension_numbers = #tpu.dot_dimension_numbers<[1], [0], [0], [1], [0, 0, 1, 1], [], []>} : vector<2x8xf32>, vector<8x32xf32>, vector<2x32xf32> -> vector<2x32xf32>
    %212 = arith.addf %210, %211 : vector<2x32xf32>
    %213 = vector.extract_strided_slice %212 {offsets = [0, 0], sizes = [2, 8], strides = [1, 1]} : vector<2x32xf32> to vector<2x8xf32>
    %214 = arith.negf %213 : vector<2x8xf32>
    %215 = math.exp %214 : vector<2x8xf32>
    %cst_38 = arith.constant 1.000000e+00 : f32
    %216 = vector.broadcast %cst_38 : f32 to vector<2x8xf32>
    %217 = arith.addf %216, %215 : vector<2x8xf32>
    %218 = arith.divf %216, %217 : vector<2x8xf32>
    %219 = vector.extract_strided_slice %212 {offsets = [0, 8], sizes = [2, 8], strides = [1, 1]} : vector<2x32xf32> to vector<2x8xf32>
    %220 = arith.negf %219 : vector<2x8xf32>
    %221 = math.exp %220 : vector<2x8xf32>
    %cst_39 = arith.constant 1.000000e+00 : f32
    %222 = vector.broadcast %cst_39 : f32 to vector<2x8xf32>
    %223 = arith.addf %222, %221 : vector<2x8xf32>
    %224 = arith.divf %222, %223 : vector<2x8xf32>
    %225 = vector.extract_strided_slice %212 {offsets = [0, 16], sizes = [2, 8], strides = [1, 1]} : vector<2x32xf32> to vector<2x8xf32>
    %226 = math.tanh %225 : vector<2x8xf32>
    %227 = vector.extract_strided_slice %212 {offsets = [0, 24], sizes = [2, 8], strides = [1, 1]} : vector<2x32xf32> to vector<2x8xf32>
    %228 = arith.negf %227 : vector<2x8xf32>
    %229 = math.exp %228 : vector<2x8xf32>
    %cst_40 = arith.constant 1.000000e+00 : f32
    %230 = vector.broadcast %cst_40 : f32 to vector<2x8xf32>
    %231 = arith.addf %230, %229 : vector<2x8xf32>
    %232 = arith.divf %230, %231 : vector<2x8xf32>
    %233 = arith.mulf %224, %207 : vector<2x8xf32>
    %234 = arith.mulf %218, %226 : vector<2x8xf32>
    %235 = arith.addf %233, %234 : vector<2x8xf32>
    %236 = math.tanh %235 : vector<2x8xf32>
    %237 = arith.mulf %232, %236 : vector<2x8xf32>
    %c0_41 = arith.constant 0 : index
    %c0_42 = arith.constant 0 : index
    %238 = vector.load %arg4[%c0_41, %c0_42] : memref<1x8xf32, #tpu.memory_space<vmem>>, vector<1x8xf32>
    %239 = vector.broadcast %238 : vector<1x8xf32> to vector<2x8xf32>
    %240 = arith.mulf %237, %239 : vector<2x8xf32>
    %cst_43 = arith.constant dense<0.000000e+00> : vector<2xf32>
    %241 = vector.multi_reduction <add>, %240, %cst_43 [1] : vector<2x8xf32> to vector<2xf32>
    %242 = vector.shape_cast %241 : vector<2xf32> to vector<2x1xf32>
    %c0_44 = arith.constant 0 : index
    %c0_45 = arith.constant 0 : index
    %243 = vector.load %arg5[%c0_44, %c0_45] : memref<1x1xf32, #tpu.memory_space<vmem>>, vector<1x1xf32>
    %244 = vector.broadcast %243 : vector<1x1xf32> to vector<2x1xf32>
    %245 = arith.addf %242, %244 : vector<2x1xf32>
    %c0_46 = arith.constant 0 : index
    %c0_47 = arith.constant 0 : index
    %246 = vector.load %arg6[%c0_46, %c0_47] : memref<2x1xf32, #tpu.memory_space<vmem>>, vector<2x1xf32>
    tpu.vector_store %arg6[%c0_46, %c0_47], %245 {strides = array<i32>} : memref<2x1xf32, #tpu.memory_space<vmem>>, vector<2x1xf32>,
    return
  }
}

</mosaic_0001>

<llo_original>
// kernel: text_mode_forward.1
$region0: #{text_mode_forward.1}
  #allocation0 [shape = 'u32[]', space=smem, size = 0x4, offset = 0x4, fixed_abs, tag = 'smem constant byte address 0x4 - core index']
  #allocation1 [shape = 'u32[144,128]{1,0:T(1,128)}', space=vmem, size = 0x12000, scoped, tag = 'internal scratch']
  #allocation2 [shape = 'f32[1,1]{1,0:T(1,128)S(1)}', space=vmem, size = 0x200, scoped, tag = 'scoped memory for text_mode_forward.1']
  %s0 = inlined_call_operand.vmem [shape: s32[16,1], index: 0, kind: input, shape index: {}]
  %s1 = inlined_call_operand.vmem [shape: f32[5,32], index: 1, kind: input, shape index: {}]
  %s2 = inlined_call_operand.vmem [shape: f32[8,32], index: 2, kind: input, shape index: {}]
  %s3 = inlined_call_operand.vmem [shape: f32[1,32], index: 3, kind: input, shape index: {}]
  %s4 = inlined_call_operand.vmem [shape: f32[1,8], index: 4, kind: input, shape index: {}]
  %s5 = inlined_call_operand.<no memory space> [shape: f32[1,1], index: 5, kind: input, shape index: {}]
  %s6 = inlined_call_operand.vmem [shape: f32[2,1], index: 6, kind: output, shape index: {}]
  %s7 = sld [smem:[#allocation0]]
  $region34: #{text_mode_forward.1} parent=0
    _
  %s9 = ssub.s32 1, %s7
  %s10 = scalar_select 0, %s9, %s7
  %v11 = vstv %s5
  %12 = vst [vmem:[#allocation2] sm:$0x1] %v11
  // Predicated region
  $region2: #{text_mode_forward.1} parent=0 // pred_check
    _
  $region3: #{text_mode_forward.1} parent=0 // pred_check_branch
    %14 = sbr.rel (0) target = $region5
  $region4: #{text_mode_forward.1} parent=0 // pred_region
    _
  $region5: #{text_mode_forward.1} parent=0 // pred_fallthru
    _
  // Predicated region
  $region6: #{text_mode_forward.1} parent=0 // pred_check
    _
  $region7: #{text_mode_forward.1} parent=0 // pred_check_branch
    %16 = sbr.rel (0) target = $region9
  $region8: #{text_mode_forward.1} parent=0 // pred_region
    _
  $region9: #{text_mode_forward.1} parent=0 // pred_fallthru
    _
  // Predicated region
  $region10: #{text_mode_forward.1} parent=0 // pred_check
    _
  $region11: #{text_mode_forward.1} parent=0 // pred_check_branch
    %18 = sbr.rel (0) target = $region13
  $region12: #{text_mode_forward.1} parent=0 // pred_region
    _
  $region13: #{text_mode_forward.1} parent=0 // pred_fallthru
    _
  // Predicated region
  $region14: #{text_mode_forward.1} parent=0 // pred_check
    _
  $region15: #{text_mode_forward.1} parent=0 // pred_check_branch
    %20 = sbr.rel (0) target = $region17
  $region16: #{text_mode_forward.1} parent=0 // pred_region
    _
  $region17: #{text_mode_forward.1} parent=0 // pred_fallthru
    _
  // Predicated region
  $region18: #{text_mode_forward.1} parent=0 // pred_check
    _
  $region19: #{text_mode_forward.1} parent=0 // pred_check_branch
    %22 = sbr.rel (0) target = $region21
  $region20: #{text_mode_forward.1} parent=0 // pred_region
    _
  $region21: #{text_mode_forward.1} parent=0 // pred_fallthru
    _
  // Predicated region
  $region22: #{text_mode_forward.1} parent=0 // pred_check
    _
  $region23: #{text_mode_forward.1} parent=0 // pred_check_branch
    %24 = sbr.rel (0) target = $region25
  $region24: #{text_mode_forward.1} parent=0 // pred_region
    _
  $region25: #{text_mode_forward.1} parent=0 // pred_fallthru
    _
  %v25 = vlaneseq
  %v26 = vand.u32 %v25, 127
  %v27 = vld [vmem:[%s0] sm:$0xff]
  %v28 = vld [vmem:[%s0 + $0x8] sm:$0xff]
  %29 = vset.pattern.permute.xlu0 0
  %30 = vperm.xlu0 %29, %v27
  %v31 = vpop.permute.xlu0 %30
  %32 = vset.pattern.permute.xlu0 0
  %33 = vperm.xlu0 %32, %v28
  %v34 = vpop.permute.xlu0 %33
  %vm35 = vcmp.eq.s32.totalorder %v31, %v26
  %vm36 = vcmp.eq.s32.totalorder %v34, %v26
  %v37 = vsel %vm35, 1, 0
  %v38 = vsel %vm36, 1, 0
  %v39 = vcvt.s32.f32 %v37
  %v40 = vcvt.s32.f32 %v38
  %v41 = vld [vmem:[%s1] sm:$0x1f]
  %v42 = vld [vmem:[%s3] sm:$0x1]
  %v44 = vlaneseq
  %v45 = vshrl.u32 %v44, 7
  %v46 = vsub.s32 0, %v45
  %v47 = vrot.slane %v42, %v46
  %vm49 = vcmask 39936
  %v51 = vsel %vm49, %v39, 0
  %v54 = vsel %vm49, %v40, 0
  %vm56 = vcmask 1044480
  %v58 = vsel %vm56, %v41, 0
  %60 = vmatprep.subr.mxu0 0.0
  %61 = vmatpush1.msra.mxu0 0.0
  %62 = vmatprep.subr.mxu0 0.0
  %63 = vmatpush1.msra.mxu0 0.0
  %64 = vmatprep.subr.mxu0 0.0
  %65 = vmatpush1.msra.mxu0 0.0
  %66 = vmatprep.subr.mxu0 0.0
  %67 = vmatpush1.msra.mxu0 0.0
  %68 = vmatprep.subr.mxu0 0.0
  %69 = vmatpush1.msra.mxu0 0.0
  %70 = vmatprep.subr.mxu0 0.0
  %71 = vmatpush1.msra.mxu0 0.0
  %72 = vmatprep.subr.mxu0 0.0
  %73 = vmatpush1.msra.mxu0 0.0
  %74 = vmatprep.subr.mxu0 0.0
  %75 = vmatpush1.msra.mxu0 0.0
  %76 = vmatprep.subr.mxu0 0.0
  %77 = vmatpush1.msra.mxu0 0.0
  %78 = vmatprep.subr.mxu0 0.0
  %79 = vmatpush1.msra.mxu0 0.0
  %80 = vmatprep.subr.mxu0 0.0
  %81 = vmatpush1.msra.mxu0 0.0
  %82 = vmatprep.subr.mxu0 0.0
  %83 = vmatpush1.msra.mxu0 0.0
  %84 = vmatprep.subr.mxu0 0.0
  %85 = vmatpush1.msra.mxu0 0.0
  %86 = vmatprep.subr.mxu0 0.0
  %87 = vmatpush1.msra.mxu0 0.0
  %88 = vmatprep.subr.mxu0 0.0
  %89 = vmatpush1.msra.mxu0 0.0
  %90 = vmatprep.subr.mxu0 0.0
  %91 = vmatpush1.msra.mxu0 %v58
  %92 = vmatprep.subr.mxu0 0.0
  %93 = vmatpush2.msra.mxu0 0.0
  %94 = vmatprep.subr.mxu0 0.0
  %95 = vmatpush2.msra.mxu0 0.0
  %96 = vmatprep.subr.mxu0 0.0
  %97 = vmatpush2.msra.mxu0 0.0
  %98 = vmatprep.subr.mxu0 0.0
  %99 = vmatpush2.msra.mxu0 0.0
  %100 = vmatprep.subr.mxu0 0.0
  %101 = vmatpush2.msra.mxu0 0.0
  %102 = vmatprep.subr.mxu0 0.0
  %103 = vmatpush2.msra.mxu0 0.0
  %104 = vmatprep.subr.mxu0 0.0
  %105 = vmatpush2.msra.mxu0 0.0
  %106 = vmatprep.subr.mxu0 0.0
  %107 = vmatpush2.msra.mxu0 0.0
  %108 = vmatprep.subr.mxu0 0.0
  %109 = vmatpush2.msra.mxu0 0.0
  %110 = vmatprep.subr.mxu0 0.0
  %111 = vmatpush2.msra.mxu0 0.0
  %112 = vmatprep.subr.mxu0 0.0
  %113 = vmatpush2.msra.mxu0 0.0
  %114 = vmatprep.subr.mxu0 0.0
  %115 = vmatpush2.msra.mxu0 0.0
  %116 = vmatprep.subr.mxu0 0.0
  %117 = vmatpush2.msra.mxu0 0.0
  %118 = vmatprep.subr.mxu0 0.0
  %119 = vmatpush2.msra.mxu0 0.0
  %120 = vmatprep.subr.mxu0 0.0
  %121 = vmatpush2.msra.mxu0 0.0
  %122 = vmatprep.subr.mxu0 0.0
  %123 = vmatpush2.msra.mxu0 0.0
  %124 = vmatprep.mubr.f32.mxu0 0.0
  %125 = vmatmul.mubr.f32.gmra.mxu0 %v51
  %v126 = vpop.f32.mrf.mxu0
  %v127 = vadd.f32 %v47, %v126
  %v128 = vpop.f32.mrf.mxu0
  %129 = vmatprep.mubr.f32.mxu0 0.0
  %130 = vmatmul.mubr.f32.gmra.mxu0 %v54
  %v131 = vpop.f32.mrf.mxu0
  %v132 = vadd.f32 %v47, %v131
  %v133 = vpop.f32.mrf.mxu0
  %134 = vdwg.mxu0
  %v135 = vld [vmem:[%s2] sm:$0xff]
  %vm136 = vcmask 64512
  %v138 = vsel %vm136, 0.0, 0
  %140 = vmatprep.subr.mxu0 0.0
  %141 = vmatpush1.msra.mxu0 0.0
  %142 = vmatprep.subr.mxu0 0.0
  %143 = vmatpush1.msra.mxu0 0.0
  %144 = vmatprep.subr.mxu0 0.0
  %145 = vmatpush1.msra.mxu0 0.0
  %146 = vmatprep.subr.mxu0 0.0
  %147 = vmatpush1.msra.mxu0 0.0
  %148 = vmatprep.subr.mxu0 0.0
  %149 = vmatpush1.msra.mxu0 0.0
  %150 = vmatprep.subr.mxu0 0.0
  %151 = vmatpush1.msra.mxu0 0.0
  %152 = vmatprep.subr.mxu0 0.0
  %153 = vmatpush1.msra.mxu0 0.0
  %154 = vmatprep.subr.mxu0 0.0
  %155 = vmatpush1.msra.mxu0 0.0
  %156 = vmatprep.subr.mxu0 0.0
  %157 = vmatpush1.msra.mxu0 0.0
  %158 = vmatprep.subr.mxu0 0.0
  %159 = vmatpush1.msra.mxu0 0.0
  %160 = vmatprep.subr.mxu0 0.0
  %161 = vmatpush1.msra.mxu0 0.0
  %162 = vmatprep.subr.mxu0 0.0
  %163 = vmatpush1.msra.mxu0 0.0
  %164 = vmatprep.subr.mxu0 0.0
  %165 = vmatpush1.msra.mxu0 0.0
  %166 = vmatprep.subr.mxu0 0.0
  %167 = vmatpush1.msra.mxu0 0.0
  %168 = vmatprep.subr.mxu0 0.0
  %169 = vmatpush1.msra.mxu0 0.0
  %170 = vmatprep.subr.mxu0 0.0
  %171 = vmatpush1.msra.mxu0 %v135
  %172 = vmatprep.subr.mxu0 0.0
  %173 = vmatpush2.msra.mxu0 0.0
  %174 = vmatprep.subr.mxu0 0.0
  %175 = vmatpush2.msra.mxu0 0.0
  %176 = vmatprep.subr.mxu0 0.0
  %177 = vmatpush2.msra.mxu0 0.0
  %178 = vmatprep.subr.mxu0 0.0
  %179 = vmatpush2.msra.mxu0 0.0
  %180 = vmatprep.subr.mxu0 0.0
  %181 = vmatpush2.msra.mxu0 0.0
  %182 = vmatprep.subr.mxu0 0.0
  %183 = vmatpush2.msra.mxu0 0.0
  %184 = vmatprep.subr.mxu0 0.0
  %185 = vmatpush2.msra.mxu0 0.0
  %186 = vmatprep.subr.mxu0 0.0
  %187 = vmatpush2.msra.mxu0 0.0
  %188 = vmatprep.subr.mxu0 0.0
  %189 = vmatpush2.msra.mxu0 0.0
  %190 = vmatprep.subr.mxu0 0.0
  %191 = vmatpush2.msra.mxu0 0.0
  %192 = vmatprep.subr.mxu0 0.0
  %193 = vmatpush2.msra.mxu0 0.0
  %194 = vmatprep.subr.mxu0 0.0
  %195 = vmatpush2.msra.mxu0 0.0
  %196 = vmatprep.subr.mxu0 0.0
  %197 = vmatpush2.msra.mxu0 0.0
  %198 = vmatprep.subr.mxu0 0.0
  %199 = vmatpush2.msra.mxu0 0.0
  %200 = vmatprep.subr.mxu0 0.0
  %201 = vmatpush2.msra.mxu0 0.0
  %202 = vmatprep.subr.mxu0 0.0
  %203 = vmatpush2.msra.mxu0 0.0
  %204 = vmatprep.mubr.f32.mxu0 0.0
  %205 = vmatmul.mubr.f32.gmra.mxu0 %v138
  %v206 = vpop.f32.mrf.mxu0
  %v207 = vadd.f32 0.0, %v206
  %v208 = vpop.f32.mrf.mxu0
  %209 = vdwg.mxu0
  %v210 = vadd.f32 %v127, %v207
  %v211 = vxor.u32 %v210, 2147483648
  %v212 = vmul.f32 %v211, 1.442695
  %v213 = vpow.pop %v212
  %v214 = vadd.f32 %v213, 1.0
  %v215 = vrcp.pop %v214
  %v216 = vmul.f32 1.0, %v215
  %v217 = vtanh.pop %v210
  %v218 = vmul.f32 %v216, 0.0
  %220 = vrot.lane.b32.xlu0 %v217, 112
  %v221 = vpop.permute.xlu0 %220
  %v223 = vmul.f32 %v216, %v221
  %225 = vrot.lane.b32.xlu0 %v223, 8
  %v226 = vpop.permute.xlu0 %225
  %v228 = vadd.f32 %v218, %v226
  %v229 = vtanh.pop %v228
  %231 = vrot.lane.b32.xlu0 %v229, 16
  %v232 = vpop.permute.xlu0 %231
  %v234 = vmul.f32 %v216, %v232
  %236 = vrot.lane.b32.xlu0 %v234, 104
  %v237 = vpop.permute.xlu0 %236
  %v238 = vsel %vm136, %v237, 0
  %240 = vmatprep.subr.mxu0 0.0
  %241 = vmatpush1.msra.mxu0 0.0
  %242 = vmatprep.subr.mxu0 0.0
  %243 = vmatpush1.msra.mxu0 0.0
  %244 = vmatprep.subr.mxu0 0.0
  %245 = vmatpush1.msra.mxu0 0.0
  %246 = vmatprep.subr.mxu0 0.0
  %247 = vmatpush1.msra.mxu0 0.0
  %248 = vmatprep.subr.mxu0 0.0
  %249 = vmatpush1.msra.mxu0 0.0
  %250 = vmatprep.subr.mxu0 0.0
  %251 = vmatpush1.msra.mxu0 0.0
  %252 = vmatprep.subr.mxu0 0.0
  %253 = vmatpush1.msra.mxu0 0.0
  %254 = vmatprep.subr.mxu0 0.0
  %255 = vmatpush1.msra.mxu0 0.0
  %256 = vmatprep.subr.mxu0 0.0
  %257 = vmatpush1.msra.mxu0 0.0
  %258 = vmatprep.subr.mxu0 0.0
  %259 = vmatpush1.msra.mxu0 0.0
  %260 = vmatprep.subr.mxu0 0.0
  %261 = vmatpush1.msra.mxu0 0.0
  %262 = vmatprep.subr.mxu0 0.0
  %263 = vmatpush1.msra.mxu0 0.0
  %264 = vmatprep.subr.mxu0 0.0
  %265 = vmatpush1.msra.mxu0 0.0
  %266 = vmatprep.subr.mxu0 0.0
  %267 = vmatpush1.msra.mxu0 0.0
  %268 = vmatprep.subr.mxu0 0.0
  %269 = vmatpush1.msra.mxu0 0.0
  %270 = vmatprep.subr.mxu0 0.0
  %271 = vmatpush1.msra.mxu0 %v135
  %272 = vmatprep.subr.mxu0 0.0
  %273 = vmatpush2.msra.mxu0 0.0
  %274 = vmatprep.subr.mxu0 0.0
  %275 = vmatpush2.msra.mxu0 0.0
  %276 = vmatprep.subr.mxu0 0.0
  %277 = vmatpush2.msra.mxu0 0.0
  %278 = vmatprep.subr.mxu0 0.0
  %279 = vmatpush2.msra.mxu0 0.0
  %280 = vmatprep.subr.mxu0 0.0
  %281 = vmatpush2.msra.mxu0 0.0
  %282 = vmatprep.subr.mxu0 0.0
  %283 = vmatpush2.msra.mxu0 0.0
  %284 = vmatprep.subr.mxu0 0.0
  %285 = vmatpush2.msra.mxu0 0.0
  %286 = vmatprep.subr.mxu0 0.0
  %287 = vmatpush2.msra.mxu0 0.0
  %288 = vmatprep.subr.mxu0 0.0
  %289 = vmatpush2.msra.mxu0 0.0
  %290 = vmatprep.subr.mxu0 0.0
  %291 = vmatpush2.msra.mxu0 0.0
  %292 = vmatprep.subr.mxu0 0.0
  %293 = vmatpush2.msra.mxu0 0.0
  %294 = vmatprep.subr.mxu0 0.0
  %295 = vmatpush2.msra.mxu0 0.0
  %296 = vmatprep.subr.mxu0 0.0
  %297 = vmatpush2.msra.mxu0 0.0
  %298 = vmatprep.subr.mxu0 0.0
  %299 = vmatpush2.msra.mxu0 0.0
  %300 = vmatprep.subr.mxu0 0.0
  %301 = vmatpush2.msra.mxu0 0.0
  %302 = vmatprep.subr.mxu0 0.0
  %303 = vmatpush2.msra.mxu0 0.0
  %304 = vmatprep.mubr.f32.mxu0 0.0
  %305 = vmatmul.mubr.f32.gmra.mxu0 %v238
  %v306 = vpop.f32.mrf.mxu0
  %v307 = vadd.f32 0.0, %v306
  %v308 = vpop.f32.mrf.mxu0
  %309 = vdwg.mxu0
  %v311 = vrot.slane %v307, 6
  %v313 = vadd.f32 %v127, %v311
  %v314 = vxor.u32 %v313, 2147483648
  %v315 = vmul.f32 %v314, 1.442695
  %v316 = vpow.pop %v315
  %v317 = vadd.f32 %v316, 1.0
  %v318 = vrcp.pop %v317
  %v319 = vmul.f32 1.0, %v318
  %v320 = vtanh.pop %v313
  %v322 = vrot.slane %v228, 6
  %v324 = vmul.f32 %v319, %v322
  %326 = vrot.lane.b32.xlu0 %v320, 112
  %v327 = vpop.permute.xlu0 %326
  %v329 = vmul.f32 %v319, %v327
  %331 = vrot.lane.b32.xlu0 %v329, 8
  %v332 = vpop.permute.xlu0 %331
  %v334 = vadd.f32 %v324, %v332
  %v335 = vtanh.pop %v334
  %337 = vrot.lane.b32.xlu0 %v335, 16
  %v338 = vpop.permute.xlu0 %337
  %v340 = vmul.f32 %v319, %v338
  %v342 = vrot.slane %v340, 2
  %343 = vrot.lane.b32.xlu0 %v342, 104
  %v344 = vpop.permute.xlu0 %343
  %v345 = vsel %vm136, %v344, 0
  %347 = vmatprep.subr.mxu0 0.0
  %348 = vmatpush1.msra.mxu0 0.0
  %349 = vmatprep.subr.mxu0 0.0
  %350 = vmatpush1.msra.mxu0 0.0
  %351 = vmatprep.subr.mxu0 0.0
  %352 = vmatpush1.msra.mxu0 0.0
  %353 = vmatprep.subr.mxu0 0.0
  %354 = vmatpush1.msra.mxu0 0.0
  %355 = vmatprep.subr.mxu0 0.0
  %356 = vmatpush1.msra.mxu0 0.0
  %357 = vmatprep.subr.mxu0 0.0
  %358 = vmatpush1.msra.mxu0 0.0
  %359 = vmatprep.subr.mxu0 0.0
  %360 = vmatpush1.msra.mxu0 0.0
  %361 = vmatprep.subr.mxu0 0.0
  %362 = vmatpush1.msra.mxu0 0.0
  %363 = vmatprep.subr.mxu0 0.0
  %364 = vmatpush1.msra.mxu0 0.0
  %365 = vmatprep.subr.mxu0 0.0
  %366 = vmatpush1.msra.mxu0 0.0
  %367 = vmatprep.subr.mxu0 0.0
  %368 = vmatpush1.msra.mxu0 0.0
  %369 = vmatprep.subr.mxu0 0.0
  %370 = vmatpush1.msra.mxu0 0.0
  %371 = vmatprep.subr.mxu0 0.0
  %372 = vmatpush1.msra.mxu0 0.0
  %373 = vmatprep.subr.mxu0 0.0
  %374 = vmatpush1.msra.mxu0 0.0
  %375 = vmatprep.subr.mxu0 0.0
  %376 = vmatpush1.msra.mxu0 0.0
  %377 = vmatprep.subr.mxu0 0.0
  %378 = vmatpush1.msra.mxu0 %v135
  %379 = vmatprep.subr.mxu0 0.0
  %380 = vmatpush2.msra.mxu0 0.0
  %381 = vmatprep.subr.mxu0 0.0
  %382 = vmatpush2.msra.mxu0 0.0
  %383 = vmatprep.subr.mxu0 0.0
  %384 = vmatpush2.msra.mxu0 0.0
  %385 = vmatprep.subr.mxu0 0.0
  %386 = vmatpush2.msra.mxu0 0.0
  %387 = vmatprep.subr.mxu0 0.0
  %388 = vmatpush2.msra.mxu0 0.0
  %389 = vmatprep.subr.mxu0 0.0
  %390 = vmatpush2.msra.mxu0 0.0
  %391 = vmatprep.subr.mxu0 0.0
  %392 = vmatpush2.msra.mxu0 0.0
  %393 = vmatprep.subr.mxu0 0.0
  %394 = vmatpush2.msra.mxu0 0.0
  %395 = vmatprep.subr.mxu0 0.0
  %396 = vmatpush2.msra.mxu0 0.0
  %397 = vmatprep.subr.mxu0 0.0
  %398 = vmatpush2.msra.mxu0 0.0
  %399 = vmatprep.subr.mxu0 0.0
  %400 = vmatpush2.msra.mxu0 0.0
  %401 = vmatprep.subr.mxu0 0.0
  %402 = vmatpush2.msra.mxu0 0.0
  %403 = vmatprep.subr.mxu0 0.0
  %404 = vmatpush2.msra.mxu0 0.0
  %405 = vmatprep.subr.mxu0 0.0
  %406 = vmatpush2.msra.mxu0 0.0
  %407 = vmatprep.subr.mxu0 0.0
  %408 = vmatpush2.msra.mxu0 0.0
  %409 = vmatprep.subr.mxu0 0.0
  %410 = vmatpush2.msra.mxu0 0.0
  %411 = vmatprep.mubr.f32.mxu0 0.0
  %412 = vmatmul.mubr.f32.gmra.mxu0 %v345
  %v413 = vpop.f32.mrf.mxu0
  %v414 = vadd.f32 0.0, %v413
  %v415 = vpop.f32.mrf.mxu0
  %416 = vdwg.mxu0
  %v418 = vrot.slane %v414, 4
  %v420 = vadd.f32 %v127, %v418
  %v421 = vxor.u32 %v420, 2147483648
  %v422 = vmul.f32 %v421, 1.442695
  %v423 = vpow.pop %v422
  %v424 = vadd.f32 %v423, 1.0
  %v425 = vrcp.pop %v424
  %v426 = vmul.f32 1.0, %v425
  %v427 = vtanh.pop %v420
  %v429 = vrot.slane %v334, 6
  %v431 = vmul.f32 %v426, %v429
  %433 = vrot.lane.b32.xlu0 %v427, 112
  %v434 = vpop.permute.xlu0 %433
  %v436 = vmul.f32 %v426, %v434
  %438 = vrot.lane.b32.xlu0 %v436, 8
  %v439 = vpop.permute.xlu0 %438
  %v441 = vadd.f32 %v431, %v439
  %v442 = vtanh.pop %v441
  %444 = vrot.lane.b32.xlu0 %v442, 16
  %v445 = vpop.permute.xlu0 %444
  %v447 = vmul.f32 %v426, %v445
  %v449 = vrot.slane %v447, 4
  %450 = vrot.lane.b32.xlu0 %v449, 104
  %v451 = vpop.permute.xlu0 %450
  %v452 = vsel %vm136, %v451, 0
  %454 = vmatprep.subr.mxu0 0.0
  %455 = vmatpush1.msra.mxu0 0.0
  %456 = vmatprep.subr.mxu0 0.0
  %457 = vmatpush1.msra.mxu0 0.0
  %458 = vmatprep.subr.mxu0 0.0
  %459 = vmatpush1.msra.mxu0 0.0
  %460 = vmatprep.subr.mxu0 0.0
  %461 = vmatpush1.msra.mxu0 0.0
  %462 = vmatprep.subr.mxu0 0.0
  %463 = vmatpush1.msra.mxu0 0.0
  %464 = vmatprep.subr.mxu0 0.0
  %465 = vmatpush1.msra.mxu0 0.0
  %466 = vmatprep.subr.mxu0 0.0
  %467 = vmatpush1.msra.mxu0 0.0
  %468 = vmatprep.subr.mxu0 0.0
  %469 = vmatpush1.msra.mxu0 0.0
  %470 = vmatprep.subr.mxu0 0.0
  %471 = vmatpush1.msra.mxu0 0.0
  %472 = vmatprep.subr.mxu0 0.0
  %473 = vmatpush1.msra.mxu0 0.0
  %474 = vmatprep.subr.mxu0 0.0
  %475 = vmatpush1.msra.mxu0 0.0
  %476 = vmatprep.subr.mxu0 0.0
  %477 = vmatpush1.msra.mxu0 0.0
  %478 = vmatprep.subr.mxu0 0.0
  %479 = vmatpush1.msra.mxu0 0.0
  %480 = vmatprep.subr.mxu0 0.0
  %481 = vmatpush1.msra.mxu0 0.0
  %482 = vmatprep.subr.mxu0 0.0
  %483 = vmatpush1.msra.mxu0 0.0
  %484 = vmatprep.subr.mxu0 0.0
  %485 = vmatpush1.msra.mxu0 %v135
  %486 = vmatprep.subr.mxu0 0.0
  %487 = vmatpush2.msra.mxu0 0.0
  %488 = vmatprep.subr.mxu0 0.0
  %489 = vmatpush2.msra.mxu0 0.0
  %490 = vmatprep.subr.mxu0 0.0
  %491 = vmatpush2.msra.mxu0 0.0
  %492 = vmatprep.subr.mxu0 0.0
  %493 = vmatpush2.msra.mxu0 0.0
  %494 = vmatprep.subr.mxu0 0.0
  %495 = vmatpush2.msra.mxu0 0.0
  %496 = vmatprep.subr.mxu0 0.0
  %497 = vmatpush2.msra.mxu0 0.0
  %498 = vmatprep.subr.mxu0 0.0
  %499 = vmatpush2.msra.mxu0 0.0
  %500 = vmatprep.subr.mxu0 0.0
  %501 = vmatpush2.msra.mxu0 0.0
  %502 = vmatprep.subr.mxu0 0.0
  %503 = vmatpush2.msra.mxu0 0.0
  %504 = vmatprep.subr.mxu0 0.0
  %505 = vmatpush2.msra.mxu0 0.0
  %506 = vmatprep.subr.mxu0 0.0
  %507 = vmatpush2.msra.mxu0 0.0
  %508 = vmatprep.subr.mxu0 0.0
  %509 = vmatpush2.msra.mxu0 0.0
  %510 = vmatprep.subr.mxu0 0.0
  %511 = vmatpush2.msra.mxu0 0.0
  %512 = vmatprep.subr.mxu0 0.0
  %513 = vmatpush2.msra.mxu0 0.0
  %514 = vmatprep.subr.mxu0 0.0
  %515 = vmatpush2.msra.mxu0 0.0
  %516 = vmatprep.subr.mxu0 0.0
  %517 = vmatpush2.msra.mxu0 0.0
  %518 = vmatprep.mubr.f32.mxu0 0.0
  %519 = vmatmul.mubr.f32.gmra.mxu0 %v452
  %v520 = vpop.f32.mrf.mxu0
  %v521 = vadd.f32 0.0, %v520
  %v522 = vpop.f32.mrf.mxu0
  %523 = vdwg.mxu0
  %v525 = vrot.slane %v521, 2
  %v527 = vadd.f32 %v127, %v525
  %v528 = vxor.u32 %v527, 2147483648
  %v529 = vmul.f32 %v528, 1.442695
  %v530 = vpow.pop %v529
  %v531 = vadd.f32 %v530, 1.0
  %v532 = vrcp.pop %v531
  %v533 = vmul.f32 1.0, %v532
  %v534 = vtanh.pop %v527
  %v536 = vrot.slane %v441, 6
  %v538 = vmul.f32 %v533, %v536
  %540 = vrot.lane.b32.xlu0 %v534, 112
  %v541 = vpop.permute.xlu0 %540
  %v543 = vmul.f32 %v533, %v541
  %545 = vrot.lane.b32.xlu0 %v543, 8
  %v546 = vpop.permute.xlu0 %545
  %v548 = vadd.f32 %v538, %v546
  %v549 = vtanh.pop %v548
  %551 = vrot.lane.b32.xlu0 %v549, 16
  %v552 = vpop.permute.xlu0 %551
  %v554 = vmul.f32 %v533, %v552
  %v556 = vrot.slane %v554, 6
  %557 = vrot.lane.b32.xlu0 %v556, 104
  %v558 = vpop.permute.xlu0 %557
  %v559 = vsel %vm136, %v558, 0
  %561 = vmatprep.subr.mxu0 0.0
  %562 = vmatpush1.msra.mxu0 0.0
  %563 = vmatprep.subr.mxu0 0.0
  %564 = vmatpush1.msra.mxu0 0.0
  %565 = vmatprep.subr.mxu0 0.0
  %566 = vmatpush1.msra.mxu0 0.0
  %567 = vmatprep.subr.mxu0 0.0
  %568 = vmatpush1.msra.mxu0 0.0
  %569 = vmatprep.subr.mxu0 0.0
  %570 = vmatpush1.msra.mxu0 0.0
  %571 = vmatprep.subr.mxu0 0.0
  %572 = vmatpush1.msra.mxu0 0.0
  %573 = vmatprep.subr.mxu0 0.0
  %574 = vmatpush1.msra.mxu0 0.0
  %575 = vmatprep.subr.mxu0 0.0
  %576 = vmatpush1.msra.mxu0 0.0
  %577 = vmatprep.subr.mxu0 0.0
  %578 = vmatpush1.msra.mxu0 0.0
  %579 = vmatprep.subr.mxu0 0.0
  %580 = vmatpush1.msra.mxu0 0.0
  %581 = vmatprep.subr.mxu0 0.0
  %582 = vmatpush1.msra.mxu0 0.0
  %583 = vmatprep.subr.mxu0 0.0
  %584 = vmatpush1.msra.mxu0 0.0
  %585 = vmatprep.subr.mxu0 0.0
  %586 = vmatpush1.msra.mxu0 0.0
  %587 = vmatprep.subr.mxu0 0.0
  %588 = vmatpush1.msra.mxu0 0.0
  %589 = vmatprep.subr.mxu0 0.0
  %590 = vmatpush1.msra.mxu0 0.0
  %591 = vmatprep.subr.mxu0 0.0
  %592 = vmatpush1.msra.mxu0 %v135
  %593 = vmatprep.subr.mxu0 0.0
  %594 = vmatpush2.msra.mxu0 0.0
  %595 = vmatprep.subr.mxu0 0.0
  %596 = vmatpush2.msra.mxu0 0.0
  %597 = vmatprep.subr.mxu0 0.0
  %598 = vmatpush2.msra.mxu0 0.0
  %599 = vmatprep.subr.mxu0 0.0
  %600 = vmatpush2.msra.mxu0 0.0
  %601 = vmatprep.subr.mxu0 0.0
  %602 = vmatpush2.msra.mxu0 0.0
  %603 = vmatprep.subr.mxu0 0.0
  %604 = vmatpush2.msra.mxu0 0.0
  %605 = vmatprep.subr.mxu0 0.0
  %606 = vmatpush2.msra.mxu0 0.0
  %607 = vmatprep.subr.mxu0 0.0
  %608 = vmatpush2.msra.mxu0 0.0
  %609 = vmatprep.subr.mxu0 0.0
  %610 = vmatpush2.msra.mxu0 0.0
  %611 = vmatprep.subr.mxu0 0.0
  %612 = vmatpush2.msra.mxu0 0.0
  %613 = vmatprep.subr.mxu0 0.0
  %614 = vmatpush2.msra.mxu0 0.0
  %615 = vmatprep.subr.mxu0 0.0
  %616 = vmatpush2.msra.mxu0 0.0
  %617 = vmatprep.subr.mxu0 0.0
  %618 = vmatpush2.msra.mxu0 0.0
  %619 = vmatprep.subr.mxu0 0.0
  %620 = vmatpush2.msra.mxu0 0.0
  %621 = vmatprep.subr.mxu0 0.0
  %622 = vmatpush2.msra.mxu0 0.0
  %623 = vmatprep.subr.mxu0 0.0
  %624 = vmatpush2.msra.mxu0 0.0
  %625 = vmatprep.mubr.f32.mxu0 0.0
  %626 = vmatmul.mubr.f32.gmra.mxu0 %v559
  %v627 = vpop.f32.mrf.mxu0
  %v628 = vadd.f32 0.0, %v627
  %v629 = vpop.f32.mrf.mxu0
  %630 = vdwg.mxu0
  %v631 = vadd.f32 %v132, %v628
  %v632 = vxor.u32 %v631, 2147483648
  %v633 = vmul.f32 %v632, 1.442695
  %v634 = vpow.pop %v633
  %v635 = vadd.f32 %v634, 1.0
  %v636 = vrcp.pop %v635
  %v637 = vmul.f32 1.0, %v636
  %v638 = vtanh.pop %v631
  %v640 = vrot.slane %v548, 6
  %v642 = vmul.f32 %v637, %v640
  %644 = vrot.lane.b32.xlu0 %v638, 112
  %v645 = vpop.permute.xlu0 %644
  %v647 = vmul.f32 %v637, %v645
  %649 = vrot.lane.b32.xlu0 %v647, 8
  %v650 = vpop.permute.xlu0 %649
  %v652 = vadd.f32 %v642, %v650
  %v653 = vtanh.pop %v652
  %655 = vrot.lane.b32.xlu0 %v653, 16
  %v656 = vpop.permute.xlu0 %655
  %v658 = vmul.f32 %v637, %v656
  %660 = vrot.lane.b32.xlu0 %v658, 104
  %v661 = vpop.permute.xlu0 %660
  %v662 = vsel %vm136, %v661, 0
  %664 = vmatprep.subr.mxu0 0.0
  %665 = vmatpush1.msra.mxu0 0.0
  %666 = vmatprep.subr.mxu0 0.0
  %667 = vmatpush1.msra.mxu0 0.0
  %668 = vmatprep.subr.mxu0 0.0
  %669 = vmatpush1.msra.mxu0 0.0
  %670 = vmatprep.subr.mxu0 0.0
  %671 = vmatpush1.msra.mxu0 0.0
  %672 = vmatprep.subr.mxu0 0.0
  %673 = vmatpush1.msra.mxu0 0.0
  %674 = vmatprep.subr.mxu0 0.0
  %675 = vmatpush1.msra.mxu0 0.0
  %676 = vmatprep.subr.mxu0 0.0
  %677 = vmatpush1.msra.mxu0 0.0
  %678 = vmatprep.subr.mxu0 0.0
  %679 = vmatpush1.msra.mxu0 0.0
  %680 = vmatprep.subr.mxu0 0.0
  %681 = vmatpush1.msra.mxu0 0.0
  %682 = vmatprep.subr.mxu0 0.0
  %683 = vmatpush1.msra.mxu0 0.0
  %684 = vmatprep.subr.mxu0 0.0
  %685 = vmatpush1.msra.mxu0 0.0
  %686 = vmatprep.subr.mxu0 0.0
  %687 = vmatpush1.msra.mxu0 0.0
  %688 = vmatprep.subr.mxu0 0.0
  %689 = vmatpush1.msra.mxu0 0.0
  %690 = vmatprep.subr.mxu0 0.0
  %691 = vmatpush1.msra.mxu0 0.0
  %692 = vmatprep.subr.mxu0 0.0
  %693 = vmatpush1.msra.mxu0 0.0
  %694 = vmatprep.subr.mxu0 0.0
  %695 = vmatpush1.msra.mxu0 %v135
  %696 = vmatprep.subr.mxu0 0.0
  %697 = vmatpush2.msra.mxu0 0.0
  %698 = vmatprep.subr.mxu0 0.0
  %699 = vmatpush2.msra.mxu0 0.0
  %700 = vmatprep.subr.mxu0 0.0
  %701 = vmatpush2.msra.mxu0 0.0
  %702 = vmatprep.subr.mxu0 0.0
  %703 = vmatpush2.msra.mxu0 0.0
  %704 = vmatprep.subr.mxu0 0.0
  %705 = vmatpush2.msra.mxu0 0.0
  %706 = vmatprep.subr.mxu0 0.0
  %707 = vmatpush2.msra.mxu0 0.0
  %708 = vmatprep.subr.mxu0 0.0
  %709 = vmatpush2.msra.mxu0 0.0
  %710 = vmatprep.subr.mxu0 0.0
  %711 = vmatpush2.msra.mxu0 0.0
  %712 = vmatprep.subr.mxu0 0.0
  %713 = vmatpush2.msra.mxu0 0.0
  %714 = vmatprep.subr.mxu0 0.0
  %715 = vmatpush2.msra.mxu0 0.0
  %716 = vmatprep.subr.mxu0 0.0
  %717 = vmatpush2.msra.mxu0 0.0
  %718 = vmatprep.subr.mxu0 0.0
  %719 = vmatpush2.msra.mxu0 0.0
  %720 = vmatprep.subr.mxu0 0.0
  %721 = vmatpush2.msra.mxu0 0.0
  %722 = vmatprep.subr.mxu0 0.0
  %723 = vmatpush2.msra.mxu0 0.0
  %724 = vmatprep.subr.mxu0 0.0
  %725 = vmatpush2.msra.mxu0 0.0
  %726 = vmatprep.subr.mxu0 0.0
  %727 = vmatpush2.msra.mxu0 0.0
  %728 = vmatprep.mubr.f32.mxu0 0.0
  %729 = vmatmul.mubr.f32.gmra.mxu0 %v662
  %v730 = vpop.f32.mrf.mxu0
  %v731 = vadd.f32 0.0, %v730
  %v732 = vpop.f32.mrf.mxu0
  %733 = vdwg.mxu0
  %v735 = vrot.slane %v731, 6
  %v737 = vadd.f32 %v132, %v735
  %v738 = vxor.u32 %v737, 2147483648
  %v739 = vmul.f32 %v738, 1.442695
  %v740 = vpow.pop %v739
  %v741 = vadd.f32 %v740, 1.0
  %v742 = vrcp.pop %v741
  %v743 = vmul.f32 1.0, %v742
  %v744 = vtanh.pop %v737
  %v746 = vrot.slane %v652, 6
  %v748 = vmul.f32 %v743, %v746
  %750 = vrot.lane.b32.xlu0 %v744, 112
  %v751 = vpop.permute.xlu0 %750
  %v753 = vmul.f32 %v743, %v751
  %755 = vrot.lane.b32.xlu0 %v753, 8
  %v756 = vpop.permute.xlu0 %755
  %v758 = vadd.f32 %v748, %v756
  %v759 = vtanh.pop %v758
  %761 = vrot.lane.b32.xlu0 %v759, 16
  %v762 = vpop.permute.xlu0 %761
  %v764 = vmul.f32 %v743, %v762
  %v766 = vrot.slane %v764, 2
  %767 = vrot.lane.b32.xlu0 %v766, 104
  %v768 = vpop.permute.xlu0 %767
  %v769 = vsel %vm136, %v768, 0
  %771 = vmatprep.subr.mxu0 0.0
  %772 = vmatpush1.msra.mxu0 0.0
  %773 = vmatprep.subr.mxu0 0.0
  %774 = vmatpush1.msra.mxu0 0.0
  %775 = vmatprep.subr.mxu0 0.0
  %776 = vmatpush1.msra.mxu0 0.0
  %777 = vmatprep.subr.mxu0 0.0
  %778 = vmatpush1.msra.mxu0 0.0
  %779 = vmatprep.subr.mxu0 0.0
  %780 = vmatpush1.msra.mxu0 0.0
  %781 = vmatprep.subr.mxu0 0.0
  %782 = vmatpush1.msra.mxu0 0.0
  %783 = vmatprep.subr.mxu0 0.0
  %784 = vmatpush1.msra.mxu0 0.0
  %785 = vmatprep.subr.mxu0 0.0
  %786 = vmatpush1.msra.mxu0 0.0
  %787 = vmatprep.subr.mxu0 0.0
  %788 = vmatpush1.msra.mxu0 0.0
  %789 = vmatprep.subr.mxu0 0.0
  %790 = vmatpush1.msra.mxu0 0.0
  %791 = vmatprep.subr.mxu0 0.0
  %792 = vmatpush1.msra.mxu0 0.0
  %793 = vmatprep.subr.mxu0 0.0
  %794 = vmatpush1.msra.mxu0 0.0
  %795 = vmatprep.subr.mxu0 0.0
  %796 = vmatpush1.msra.mxu0 0.0
  %797 = vmatprep.subr.mxu0 0.0
  %798 = vmatpush1.msra.mxu0 0.0
  %799 = vmatprep.subr.mxu0 0.0
  %800 = vmatpush1.msra.mxu0 0.0
  %801 = vmatprep.subr.mxu0 0.0
  %802 = vmatpush1.msra.mxu0 %v135
  %803 = vmatprep.subr.mxu0 0.0
  %804 = vmatpush2.msra.mxu0 0.0
  %805 = vmatprep.subr.mxu0 0.0
  %806 = vmatpush2.msra.mxu0 0.0
  %807 = vmatprep.subr.mxu0 0.0
  %808 = vmatpush2.msra.mxu0 0.0
  %809 = vmatprep.subr.mxu0 0.0
  %810 = vmatpush2.msra.mxu0 0.0
  %811 = vmatprep.subr.mxu0 0.0
  %812 = vmatpush2.msra.mxu0 0.0
  %813 = vmatprep.subr.mxu0 0.0
  %814 = vmatpush2.msra.mxu0 0.0
  %815 = vmatprep.subr.mxu0 0.0
  %816 = vmatpush2.msra.mxu0 0.0
  %817 = vmatprep.subr.mxu0 0.0
  %818 = vmatpush2.msra.mxu0 0.0
  %819 = vmatprep.subr.mxu0 0.0
  %820 = vmatpush2.msra.mxu0 0.0
  %821 = vmatprep.subr.mxu0 0.0
  %822 = vmatpush2.msra.mxu0 0.0
  %823 = vmatprep.subr.mxu0 0.0
  %824 = vmatpush2.msra.mxu0 0.0
  %825 = vmatprep.subr.mxu0 0.0
  %826 = vmatpush2.msra.mxu0 0.0
  %827 = vmatprep.subr.mxu0 0.0
  %828 = vmatpush2.msra.mxu0 0.0
  %829 = vmatprep.subr.mxu0 0.0
  %830 = vmatpush2.msra.mxu0 0.0
  %831 = vmatprep.subr.mxu0 0.0
  %832 = vmatpush2.msra.mxu0 0.0
  %833 = vmatprep.subr.mxu0 0.0
  %834 = vmatpush2.msra.mxu0 0.0
  %835 = vmatprep.mubr.f32.mxu0 0.0
  %836 = vmatmul.mubr.f32.gmra.mxu0 %v769
  %v837 = vpop.f32.mrf.mxu0
  %v838 = vadd.f32 0.0, %v837
  %v839 = vpop.f32.mrf.mxu0
  %840 = vdwg.mxu0
  %v842 = vrot.slane %v838, 4
  %v844 = vadd.f32 %v132, %v842
  %v845 = vxor.u32 %v844, 2147483648
  %v846 = vmul.f32 %v845, 1.442695
  %v847 = vpow.pop %v846
  %v848 = vadd.f32 %v847, 1.0
  %v849 = vrcp.pop %v848
  %v850 = vmul.f32 1.0, %v849
  %v851 = vtanh.pop %v844
  %v853 = vrot.slane %v758, 6
  %v855 = vmul.f32 %v850, %v853
  %857 = vrot.lane.b32.xlu0 %v851, 112
  %v858 = vpop.permute.xlu0 %857
  %v860 = vmul.f32 %v850, %v858
  %862 = vrot.lane.b32.xlu0 %v860, 8
  %v863 = vpop.permute.xlu0 %862
  %v865 = vadd.f32 %v855, %v863
  %v866 = vtanh.pop %v865
  %868 = vrot.lane.b32.xlu0 %v866, 16
  %v869 = vpop.permute.xlu0 %868
  %v871 = vmul.f32 %v850, %v869
  %v873 = vrot.slane %v871, 4
  %874 = vrot.lane.b32.xlu0 %v873, 104
  %v875 = vpop.permute.xlu0 %874
  %v876 = vsel %vm136, %v875, 0
  %878 = vmatprep.subr.mxu0 0.0
  %879 = vmatpush1.msra.mxu0 0.0
  %880 = vmatprep.subr.mxu0 0.0
  %881 = vmatpush1.msra.mxu0 0.0
  %882 = vmatprep.subr.mxu0 0.0
  %883 = vmatpush1.msra.mxu0 0.0
  %884 = vmatprep.subr.mxu0 0.0
  %885 = vmatpush1.msra.mxu0 0.0
  %886 = vmatprep.subr.mxu0 0.0
  %887 = vmatpush1.msra.mxu0 0.0
  %888 = vmatprep.subr.mxu0 0.0
  %889 = vmatpush1.msra.mxu0 0.0
  %890 = vmatprep.subr.mxu0 0.0
  %891 = vmatpush1.msra.mxu0 0.0
  %892 = vmatprep.subr.mxu0 0.0
  %893 = vmatpush1.msra.mxu0 0.0
  %894 = vmatprep.subr.mxu0 0.0
  %895 = vmatpush1.msra.mxu0 0.0
  %896 = vmatprep.subr.mxu0 0.0
  %897 = vmatpush1.msra.mxu0 0.0
  %898 = vmatprep.subr.mxu0 0.0
  %899 = vmatpush1.msra.mxu0 0.0
  %900 = vmatprep.subr.mxu0 0.0
  %901 = vmatpush1.msra.mxu0 0.0
  %902 = vmatprep.subr.mxu0 0.0
  %903 = vmatpush1.msra.mxu0 0.0
  %904 = vmatprep.subr.mxu0 0.0
  %905 = vmatpush1.msra.mxu0 0.0
  %906 = vmatprep.subr.mxu0 0.0
  %907 = vmatpush1.msra.mxu0 0.0
  %908 = vmatprep.subr.mxu0 0.0
  %909 = vmatpush1.msra.mxu0 %v135
  %910 = vmatprep.subr.mxu0 0.0
  %911 = vmatpush2.msra.mxu0 0.0
  %912 = vmatprep.subr.mxu0 0.0
  %913 = vmatpush2.msra.mxu0 0.0
  %914 = vmatprep.subr.mxu0 0.0
  %915 = vmatpush2.msra.mxu0 0.0
  %916 = vmatprep.subr.mxu0 0.0
  %917 = vmatpush2.msra.mxu0 0.0
  %918 = vmatprep.subr.mxu0 0.0
  %919 = vmatpush2.msra.mxu0 0.0
  %920 = vmatprep.subr.mxu0 0.0
  %921 = vmatpush2.msra.mxu0 0.0
  %922 = vmatprep.subr.mxu0 0.0
  %923 = vmatpush2.msra.mxu0 0.0
  %924 = vmatprep.subr.mxu0 0.0
  %925 = vmatpush2.msra.mxu0 0.0
  %926 = vmatprep.subr.mxu0 0.0
  %927 = vmatpush2.msra.mxu0 0.0
  %928 = vmatprep.subr.mxu0 0.0
  %929 = vmatpush2.msra.mxu0 0.0
  %930 = vmatprep.subr.mxu0 0.0
  %931 = vmatpush2.msra.mxu0 0.0
  %932 = vmatprep.subr.mxu0 0.0
  %933 = vmatpush2.msra.mxu0 0.0
  %934 = vmatprep.subr.mxu0 0.0
  %935 = vmatpush2.msra.mxu0 0.0
  %936 = vmatprep.subr.mxu0 0.0
  %937 = vmatpush2.msra.mxu0 0.0
  %938 = vmatprep.subr.mxu0 0.0
  %939 = vmatpush2.msra.mxu0 0.0
  %940 = vmatprep.subr.mxu0 0.0
  %941 = vmatpush2.msra.mxu0 0.0
  %942 = vmatprep.mubr.f32.mxu0 0.0
  %943 = vmatmul.mubr.f32.gmra.mxu0 %v876
  %v944 = vpop.f32.mrf.mxu0
  %v945 = vadd.f32 0.0, %v944
  %v946 = vpop.f32.mrf.mxu0
  %947 = vdwg.mxu0
  %v949 = vrot.slane %v945, 2
  %v951 = vadd.f32 %v132, %v949
  %v952 = vxor.u32 %v951, 2147483648
  %v953 = vmul.f32 %v952, 1.442695
  %v954 = vpow.pop %v953
  %v955 = vadd.f32 %v954, 1.0
  %v956 = vrcp.pop %v955
  %v957 = vmul.f32 1.0, %v956
  %v958 = vtanh.pop %v951
  %v960 = vrot.slane %v865, 6
  %v962 = vmul.f32 %v957, %v960
  %964 = vrot.lane.b32.xlu0 %v958, 112
  %v965 = vpop.permute.xlu0 %964
  %v967 = vmul.f32 %v957, %v965
  %969 = vrot.lane.b32.xlu0 %v967, 8
  %v970 = vpop.permute.xlu0 %969
  %v972 = vadd.f32 %v962, %v970
  %v973 = vtanh.pop %v972
  %975 = vrot.lane.b32.xlu0 %v973, 16
  %v976 = vpop.permute.xlu0 %975
  %v978 = vmul.f32 %v957, %v976
  %v979 = vld [vmem:[%s4] sm:$0x1]
  %v981 = vlaneseq
  %v982 = vshrl.u32 %v981, 7
  %v983 = vsub.s32 0, %v982
  %v984 = vrot.slane %v979, %v983
  %985 = vrot.lane.b32.xlu0 %v984, 24
  %v986 = vpop.permute.xlu0 %985
  %v988 = vmul.f32 %v978, %v986
  %990 = vrot.lane.b32.xlu0 %v988, 104
  %v991 = vpop.permute.xlu0 %990
  %vm993 = vcmask 64518
  %v994 = vsel %vm993, %v991, 0.0
  %995 = vadd.xlane.f32.xlu0 %v994
  %v996 = vpop.xlane.xlu0 %995
  %v997 = vld [vmem:[#allocation2] sm:$0x1]
  %v999 = vlaneseq
  %v1000 = vshrl.u32 %v999, 7
  %v1001 = vsub.s32 0, %v1000
  %v1002 = vrot.slane %v997, %v1001
  %v1004 = vadd.f32 %v996, %v1002
  %vm1005 = vcmask 7174
  %1006 = vst.msk [vmem:[%s6 - $0x6] sm:$0xc0] %vm1005, %v1004
  // Predicated region
  $region26: #{text_mode_forward.1} parent=0 // pred_check
    _
  $region27: #{text_mode_forward.1} parent=0 // pred_check_branch
    %1008 = sbr.rel (0) target = $region29
  $region28: #{text_mode_forward.1} parent=0 // pred_region
    _
  $region29: #{text_mode_forward.1} parent=0 // pred_fallthru
    _
  // Predicated region
  $region30: #{text_mode_forward.1} parent=0 // pred_check
    _
  $region31: #{text_mode_forward.1} parent=0 // pred_check_branch
    %1010 = sbr.rel (0) target = $region33
  $region32: #{text_mode_forward.1} parent=0 // pred_region
    _
  $region33: #{text_mode_forward.1} parent=0 // pred_fallthru
    _

</llo_original>
